<compile_context>
chip_gen: v5e
topology: v5e:2x2
jax: 0.10.0
libtpu: 0.0.40
codegen_flags: <defaults>
</compile_context>

<pallas_src>
import functools

import jax
import jax.numpy as jnp
from jax import lax
from jax.experimental import pallas as pl
from jax.experimental.pallas import tpu as pltpu


_MASK_FILL = -0.7 * float(jnp.finfo(jnp.float32).max)   # large finite negative
_VMEM_CAP = 48 * 2**20        # <= ~48 MiB -> leaves headroom on v7x (64 MiB physical)
_VMEM_FLOOR = 16 * 2**20


def _pick_tile(n, candidates=(256, 128, 64, 32, 16, 8)):
    """Largest aligned tile that divides n; falls back to the full dim."""
    for c in candidates:
        if n % c == 0:
            return c
    return n


def _vmem_limit(estimate_bytes):
    return int(min(_VMEM_CAP, max(2 * estimate_bytes, _VMEM_FLOOR)))


# --------------------------------------------------------------------------- #
# Kernel 1: fused QKV projection — one lane-dense GEMM (tq, C) @ (C, 3C)
# --------------------------------------------------------------------------- #
def _qkv_proj_kernel(x_ref, w_ref, *rest, has_qkv_bias):
    rest = list(rest)
    b_ref = rest.pop(0) if has_qkv_bias else None
    o_ref = rest.pop()

    x = x_ref[0]                                            # (tq, C)
    acc = jnp.dot(x, w_ref[...], preferred_element_type=jnp.float32)   # (tq, 3C)
    if has_qkv_bias:
        acc = acc + b_ref[...].astype(jnp.float32)          # (1, 3C) broadcast
    o_ref[0] = acc.astype(o_ref.dtype)


# --------------------------------------------------------------------------- #
# Kernel 2: flash attention, grid (B, H, q_tile, kv_tile), online softmax
# --------------------------------------------------------------------------- #
def _flash_attn_kernel(q_ref, k_ref, v_ref, *rest, has_bias, has_mask):
    rest = list(rest)
    bias_ref = rest.pop(0) if has_bias else None
    mask_ref = rest.pop(0) if has_mask else None
    o_ref, m_ref, l_ref, acc_ref = rest

    kv = pl.program_id(3)

    @pl.when(kv == 0)
    def _():
        m_ref[...] = jnp.full(m_ref.shape, -jnp.inf, m_ref.dtype)
        l_ref[...] = jnp.zeros(l_ref.shape, l_ref.dtype)
        acc_ref[...] = jnp.zeros(acc_ref.shape, acc_ref.dtype)

    q = q_ref[0, 0]                                         # (tq, D) — q pre-scaled
    k = k_ref[0, 0]                                         # (tk, D)
    v = v_ref[0, 0]                                         # (tk, D)

    # scores in f32 (MXU accumulation)
    s = lax.dot_general(q, k, (((1,), (1,)), ((), ())),
                        preferred_element_type=jnp.float32)             # (tq, tk)
    if has_bias:
        s = s + bias_ref[0].astype(jnp.float32)             # native-dtype tile, upcast here
    if has_mask:
        key_mask = mask_ref[0] != 0                         # (1, tk) — broadcast over rows
        s = jnp.where(key_mask, jnp.float32(_MASK_FILL), s)

    # online softmax update
    m_prev = m_ref[...]                                     # (tq, 1)
    m_new = jnp.maximum(m_prev, jnp.max(s, axis=-1, keepdims=True))
    alpha = jnp.exp(m_prev - m_new)
    p = jnp.exp(s - m_new)                                  # (tq, tk) f32
    l_ref[...] = alpha * l_ref[...] + jnp.sum(p, axis=-1, keepdims=True)
    acc_ref[...] = alpha * acc_ref[...] + lax.dot_general(
        p.astype(v.dtype), v, (((1,), (0,)), ((), ())),
        preferred_element_type=jnp.float32)
    m_ref[...] = m_new

    @pl.when(kv == pl.num_programs(3) - 1)
    def _():
        l = l_ref[...]
        if o_ref.dtype == jnp.float32:
            out = acc_ref[...] / l                          # exact for f32 outputs
        else:
            out = acc_ref[...] * pl.reciprocal(l, approx=True)   # EUP path
        o_ref[0, 0] = out.astype(o_ref.dtype)


# --------------------------------------------------------------------------- #
# Kernel 3: output projection — one lane-dense GEMM (tq, C) @ (C, C) + bias
# --------------------------------------------------------------------------- #
def _out_proj_kernel(x_ref, w_ref, b_ref, o_ref):
    x = x_ref[0]                                            # (tq, C)
    acc = jnp.dot(x, w_ref[...], preferred_element_type=jnp.float32)
    o_ref[0] = (acc + b_ref[...].astype(jnp.float32)).astype(o_ref.dtype)


# --------------------------------------------------------------------------- #
# Wrapper
# --------------------------------------------------------------------------- #
def attention_forward(x, wqkv, wproj, bproj, num_heads,
                      mask=None, relative_position_bias=None, qk_scale=None,
                      q_bias=None, v_bias=None, q_tile=None, kv_tile=None):
    """x: (B, N, C).  Weights in PyTorch layout: wqkv (3C, C), wproj (C, C), bproj (C,)."""
    B, N, C = x.shape
    H = num_heads
    assert C % H == 0, "dim must be divisible by num_heads"
    D = C // H
    scale = qk_scale if qk_scale is not None else D ** (-0.5)

    tq = q_tile if q_tile is not None else _pick_tile(N)
    tk = kv_tile if kv_tile is not None else _pick_tile(N)
    assert N % tq == 0 and N % tk == 0, "tiles must divide the sequence length"
    n_q, n_kv = N // tq, N // tk
    itm = x.dtype.itemsize

    # ---- one-time parameter restructuring (wrapper-side, plain XLA) ----
    # F.linear(x, W) = x @ W.T ; qkv output features are ordered [q | k | v].
    wqkv_t = jnp.transpose(wqkv, (1, 0))                    # (C, 3C)
    wqkv_t = wqkv_t.at[:, :C].multiply(scale)               # fold qk scale into Q cols
    wproj_t = jnp.transpose(wproj, (1, 0))                  # (C, C)
    bproj2 = bproj.reshape(1, C)

    has_qkv_bias = (q_bias is not None) or (v_bias is not None)
    if has_qkv_bias:
        qb = q_bias if q_bias is not None else jnp.zeros((C,), x.dtype)
        vb = v_bias if v_bias is not None else jnp.zeros((C,), x.dtype)
        qkv_b = jnp.concatenate([qb * scale, jnp.zeros((C,), qb.dtype), vb])
        qkv_b = qkv_b.reshape(1, 3 * C)

    # ================= 1) fused QKV projection =================
    qkv_ops = [x, wqkv_t]
    qkv_specs = [pl.BlockSpec((1, tq, C), lambda b, i: (b, i, 0)),
                 pl.BlockSpec((C, 3 * C), lambda b, i: (0, 0))]
    if has_qkv_bias:
        qkv_ops.append(qkv_b)
        qkv_specs.append(pl.BlockSpec((1, 3 * C), lambda b, i: (0, 0)))

    qkv_est = (2 * (tq * C * itm + 3 * C * C * wqkv_t.dtype.itemsize
                    + tq * 3 * C * itm + (3 * C * itm if has_qkv_bias else 0))
               + tq * 3 * C * 4)
    qkv = pl.pallas_call(
        functools.partial(_qkv_proj_kernel, has_qkv_bias=has_qkv_bias),
        out_shape=jax.ShapeDtypeStruct((B, N, 3 * C), x.dtype),
        grid=(B, n_q),
        in_specs=qkv_specs,
        out_specs=pl.BlockSpec((1, tq, 3 * C), lambda b, i: (b, i, 0)),
        compiler_params=pltpu.CompilerParams(
            dimension_semantics=("parallel", "parallel"),
            vmem_limit_bytes=_vmem_limit(qkv_est)),
    )(*qkv_ops)

    # head-major relayout for the flash kernel (plain XLA transpose, O(B*N*C))
    qkv = qkv.reshape(B, N, 3, H, D).transpose(2, 0, 3, 1, 4)   # (3, B, H, N, D)
    q, k, v = qkv[0], qkv[1], qkv[2]

    # ================= 2) flash attention =================
    has_bias = relative_position_bias is not None
    has_mask = mask is not None

    attn_ops = [q, k, v]
    attn_specs = [
        pl.BlockSpec((1, 1, tq, D), lambda b, h, i, j: (b, h, i, 0)),
        pl.BlockSpec((1, 1, tk, D), lambda b, h, i, j: (b, h, j, 0)),
        pl.BlockSpec((1, 1, tk, D), lambda b, h, i, j: (b, h, j, 0)),
    ]
    bias_itm = 0
    if has_bias:
        attn_ops.append(relative_position_bias)             # keep native dtype in HBM/VMEM
        attn_specs.append(pl.BlockSpec((1, tq, tk), lambda b, h, i, j: (h, i, j)))
        bias_itm = relative_position_bias.dtype.itemsize
    if has_mask:
        attn_ops.append(mask.astype(jnp.int32).reshape(B, 1, N))
        attn_specs.append(pl.BlockSpec((1, 1, tk), lambda b, h, i, j: (b, 0, j)))

    attn_est = (2 * ((2 * tq * D + 2 * tk * D) * itm + tq * tk * bias_itm
                     + (tk * 4 if has_mask else 0))
                + (2 + D) * tq * 4          # m / l / acc scratch
                + 3 * tq * tk * 4)          # f32 s / p working set

    ctx = pl.pallas_call(
        functools.partial(_flash_attn_kernel, has_bias=has_bias, has_mask=has_mask),
        out_shape=jax.ShapeDtypeStruct((B, H, N, D), x.dtype),
        grid=(B, H, n_q, n_kv),
        in_specs=attn_specs,
        out_specs=pl.BlockSpec((1, 1, tq, D), lambda b, h, i, j: (b, h, i, 0)),
        scratch_shapes=[pltpu.VMEM((tq, 1), jnp.float32),     # running max
                        pltpu.VMEM((tq, 1), jnp.float32),     # running denom
                        pltpu.VMEM((tq, D), jnp.float32)],    # running context
        compiler_params=pltpu.CompilerParams(
            dimension_semantics=("parallel", "parallel", "parallel", "arbitrary"),
            vmem_limit_bytes=_vmem_limit(attn_est)),
    )(*attn_ops)

    # merge heads back to (B, N, C) — plain XLA transpose
    ctx = ctx.transpose(0, 2, 1, 3).reshape(B, N, C)

    # ================= 3) output projection =================
    proj_est = (2 * (2 * tq * C * itm + C * C * wproj_t.dtype.itemsize + C * 4)
                + tq * C * 4)
    out = pl.pallas_call(
        _out_proj_kernel,
        out_shape=jax.ShapeDtypeStruct((B, N, C), x.dtype),
        grid=(B, n_q),
        in_specs=[pl.BlockSpec((1, tq, C), lambda b, i: (b, i, 0)),
                  pl.BlockSpec((C, C), lambda b, i: (0, 0)),
                  pl.BlockSpec((1, C), lambda b, i: (0, 0))],
        out_specs=pl.BlockSpec((1, tq, C), lambda b, i: (b, i, 0)),
        compiler_params=pltpu.CompilerParams(
            dimension_semantics=("parallel", "parallel"),
            vmem_limit_bytes=_vmem_limit(proj_est)),
    )(ctx, wproj_t, bproj2)

    return out


# --------------------------------------------------------------------------- #
# Pure-JAX reference (mirrors the PyTorch forward) for validation
# --------------------------------------------------------------------------- #
def _reference(x, wqkv, wproj, bproj, num_heads, mask=None, bias=None,
               qk_scale=None, q_bias=None, v_bias=None):
    B, N, C = x.shape
    D = C // num_heads
    scale = qk_scale if qk_scale is not None else D ** (-0.5)
    qkv = x @ wqkv.T
    if (q_bias is not None) or (v_bias is not None):
        qb = q_bias if q_bias is not None else jnp.zeros((C,), x.dtype)
        vb = v_bias if v_bias is not None else jnp.zeros((C,), x.dtype)
        qkv = qkv + jnp.concatenate([qb, jnp.zeros_like(vb), vb])
    qkv = qkv.reshape(B, N, 3, num_heads, D).transpose(2, 0, 3, 1, 4)
    q, k, v = qkv[0], qkv[1], qkv[2]
    q = q * scale
    attn = jnp.einsum('bhnd,bhmd->bhnm',
                      q.astype(jnp.float32), k.astype(jnp.float32))
    if bias is not None:
        attn = attn + bias[None].astype(jnp.float32)
    if mask is not None:
        attn = jnp.where(mask[:, None, None, :].astype(bool), -jnp.inf, attn)
    attn = jax.nn.softmax(attn, axis=-1).astype(x.dtype)
    y = jnp.einsum('bhnm,bhmd->bhnd', attn, v)
    y = y.transpose(0, 2, 1, 3).reshape(B, N, C)
    return y @ wproj.T + bproj


if __name__ == "__main__":
    key = jax.random.PRNGKey(0)
    kx, kqkv, kproj, kb, kbias, kqb, kvb, kx2, kbias2 = jax.random.split(key, 9)

    # Small shapes consistent with the module: B=2, N=16, C=64, 4 heads.
    B, N, C, H = 2, 16, 64, 4
    x = jax.random.normal(kx, (B, N, C), jnp.float32)
    wqkv = jax.random.normal(kqkv, (3 * C, C), jnp.float32) * 0.1    # torch (out, in)
    wproj = jax.random.normal(kproj, (C, C), jnp.float32) * 0.1
    bproj = jax.random.normal(kb, (C,), jnp.float32) * 0.1
    rel_bias = jax.random.normal(kbias, (H, N, N), jnp.float32) * 0.5
    mask = jnp.zeros((B, N), jnp.int32).at[1, -3:].set(1)   # mask last 3 keys of batch 1

    # Variant 1: relative-position bias + key mask.
    out = attention_forward(x, wqkv, wproj, bproj, H,
                            mask=mask, relative_position_bias=rel_bias)
    out = jax.block_until_ready(out)
    ref = _reference(x, wqkv, wproj, bproj, H, mask, rel_bias)
    assert out.shape == (B, N, C)
    assert jnp.allclose(out, ref, rtol=5e-3, atol=5e-3), "mismatch (bias+mask variant)"

    # Variant 2: plain attention (no bias / no mask).
    out2 = jax.block_until_ready(attention_forward(x, wqkv, wproj, bproj, H))
    ref2 = _reference(x, wqkv, wproj, bproj, H)
    assert jnp.allclose(out2, ref2, rtol=5e-3, atol=5e-3), "mismatch (plain variant)"

    # Variant 3: longer sequence exercising the multi-tile flash path
    # (2x2 q/kv tiles, online softmax across kv steps) + qkv_bias path.
    N2 = 256
    x2 = jax.random.normal(kx2, (B, N2, C), jnp.float32)
    rel_bias2 = jax.random.normal(kbias2, (H, N2, N2), jnp.float32) * 0.5
    mask2 = jnp.zeros((B, N2), jnp.int32).at[1, -17:].set(1)
    q_b = jax.random.normal(kqb, (C,), jnp.float32) * 0.1
    v_b = jax.random.normal(kvb, (C,), jnp.float32) * 0.1
    out3 = attention_forward(x2, wqkv, wproj, bproj, H, mask=mask2,
                             relative_position_bias=rel_bias2,
                             q_bias=q_b, v_bias=v_b, q_tile=128, kv_tile=128)
    out3 = jax.block_until_ready(out3)
    ref3 = _reference(x2, wqkv, wproj, bproj, H, mask2, rel_bias2,
                      q_bias=q_b, v_bias=v_b)
    assert jnp.allclose(out3, ref3, rtol=1e-2, atol=1e-2), "mismatch (tiled+qkv_bias)"

    print("KERNEL_OK")
</pallas_src>

<mosaic_0001>
module attributes {stable_mosaic.version = 11 : i64} {
  func.func @_qkv_proj_kernel(%arg0: i32, %arg1: i32, %arg2: memref<1x16x64xf32, #tpu.memory_space<vmem>>, %arg3: memref<64x192xf32, #tpu.memory_space<vmem>>, %arg4: memref<1x16x192xf32, #tpu.memory_space<vmem>>) attributes {dimension_semantics = [#tpu.dimension_semantics<parallel>, #tpu.dimension_semantics<parallel>], iteration_bounds = array<i64: 2, 1>, scalar_prefetch = 0 : i64, scratch_operands = 0 : i64, tpu.core_type = #tpu.core_type<tc>, window_params = [{transform_indices = @transform_0, window_bounds = array<i64: 1, 16, 64>}, {pipeline_mode = #tpu.pipeline_mode<synchronous>, transform_indices = @transform_1, window_bounds = array<i64: 64, 192>}, {transform_indices = @transform_2, window_bounds = array<i64: 1, 16, 192>}]} {
    %c0 = arith.constant 0 : index
    %c0_0 = arith.constant 0 : index
    %c0_1 = arith.constant 0 : index
    %0 = vector.load %arg2[%c0, %c0_0, %c0_1] : memref<1x16x64xf32, #tpu.memory_space<vmem>>, vector<1x16x64xf32>
    %1 = vector.shape_cast %0 : vector<1x16x64xf32> to vector<16x64xf32>
    %c0_2 = arith.constant 0 : index
    %c0_3 = arith.constant 0 : index
    %2 = vector.load %arg3[%c0_2, %c0_3] : memref<64x192xf32, #tpu.memory_space<vmem>>, vector<64x192xf32>
    %cst = arith.constant dense<0.000000e+00> : vector<16x192xf32>
    %3 = tpu.matmul %1, %2, %cst {dimension_numbers = #tpu.dot_dimension_numbers<[1], [0], [0], [1], [0, 0, 1, 1], [], []>} : vector<16x64xf32>, vector<64x192xf32>, vector<16x192xf32> -> vector<16x192xf32>
    %c0_4 = arith.constant 0 : index
    %c0_5 = arith.constant 0 : index
    %c0_6 = arith.constant 0 : index
    %4 = vector.load %arg4[%c0_4, %c0_5, %c0_6] : memref<1x16x192xf32, #tpu.memory_space<vmem>>, vector<1x16x192xf32>
    %5 = vector.shape_cast %4 : vector<1x16x192xf32> to vector<16x192xf32>
    %6 = vector.shape_cast %3 : vector<16x192xf32> to vector<1x16x192xf32>
    tpu.vector_store %arg4[%c0_4, %c0_5, %c0_6], %6 {strides = array<i32>} : memref<1x16x192xf32, #tpu.memory_space<vmem>>, vector<1x16x192xf32>,
    return
  }
  func.func @transform_0(%arg0: i32, %arg1: i32) -> (i32, i32, i32) {
    %c0_i32 = arith.constant 0 : i32
    %c0_i32_0 = arith.constant 0 : i32
    return %arg0, %arg1, %c0_i32 : i32, i32, i32
  }
  func.func @transform_1(%arg0: i32, %arg1: i32) -> (i32, i32) {
    %c0_i32 = arith.constant 0 : i32
    %c0_i32_0 = arith.constant 0 : i32
    %c0_i32_1 = arith.constant 0 : i32
    return %c0_i32, %c0_i32_0 : i32, i32
  }
  func.func @transform_2(%arg0: i32, %arg1: i32) -> (i32, i32, i32) {
    %c0_i32 = arith.constant 0 : i32
    %c0_i32_0 = arith.constant 0 : i32
    return %arg0, %arg1, %c0_i32 : i32, i32, i32
  }
}

</mosaic_0001>

<llo_original>
// kernel: tpu_custom_call.1
$region0: #{tpu_custom_call.1}
  #allocation0 [shape = 'u32[]', space=smem, size = 0x4, offset = 0x4, fixed_abs, tag = 'smem constant byte address 0x4 - core index']
  #allocation1 [shape = 'u32[72,128]{1,0:T(1,128)}', space=vmem, size = 0x9000, scoped, tag = 'internal scratch']
  %s0 = inlined_call_operand.hbm [shape: f32[2,16,64], index: 0, kind: input, shape index: {}]
  %s1 = inlined_call_operand.hbm [shape: f32[64,192], index: 1, kind: input, shape index: {}]
  %s2 = inlined_call_operand.hbm [shape: f32[2,16,192], index: 2, kind: output, shape index: {}]
  %s3 = sld [smem:[#allocation0]]
  $region49: #{tpu_custom_call.1} parent=0
    _
  %s5 = ssub.s32 1, %s3
  %s6 = scalar_select 0, %s5, %s3
  $region1: #{tpu_custom_call.1} parent=0
    #allocation2 [shape = 'u8[16384]{0}', space=vmem, size = 0x4000, scoped, tag = 'input window, operand 0']
    #allocation3 [shape = 's32[2]{0}', space=sflag, size = 0x8, scoped, tag = 'scoped memory for tpu_custom_call.1']
    #allocation4 [shape = 's32[2]{0}', space=sflag, size = 0x8, scoped, tag = 'scoped memory for tpu_custom_call.1']
    #allocation5 [shape = 'u8[65536]{0}', space=vmem, size = 0x10000, scoped, tag = 'input window, operand 1, single buffered']
    #allocation6 [shape = 's32[1]{0}', space=sflag, size = 0x4, scoped, tag = 'scoped memory for tpu_custom_call.1']
    #allocation7 [shape = 'u8[32768]{0}', space=vmem, size = 0x8000, scoped, tag = 'output window, operand 0']
    %7 = vsyncpa [#allocation3], 0
    %s8 = scalar_lea.sflag [#allocation3], 1
    %9 = vsyncpa %s8, 0
    %10 = vsyncpa [#allocation6], 0
    %11 = vsyncpa [#allocation4], 0
    %s12 = scalar_lea.sflag [#allocation4], 1
    %13 = vsyncpa %s12, 0
    loop: start=0, step=1, limit=4
    $region2: #{tpu_custom_call.1} parent=1 // loop_pre_header
      _
    $region3: #{tpu_custom_call.1} parent=1 // loop_header
      %s15 = sphi 0, %s19
      %p16 = scmp.ge.s32.totalorder %s15, 4
      %s22 = sphi 0, %s34
      %s23 = sphi 0, %s30
      %s24 = sphi 0, %s22
      %s25 = sphi 0, %s23
      %s26 = sphi 0, %s24
      %s27 = sphi 0, %s25
      %s39 = sphi 0, %s41
      %s42 = sphi 0, %s39
      %s43 = sphi 0, %s42
      %s59 = sphi 0, %s43
      %s63 = sphi 0, %s63
      %s65 = sphi 0, %s63
      %s66 = sphi 0, %s65
      %s80 = sphi 0, %s66
      %s88 = sphi 0, %s90
      %s91 = sphi 0, %s88
      %s92 = sphi 0, %s91
      %s108 = sphi 0, %s92
    $region4: #{tpu_custom_call.1} parent=1 // loop_header_branch
      %18 = sbr.rel (%p16) target = $region8
    $region5: #{tpu_custom_call.1} parent=1 // loop_body
      %s20 = ssub.s32 %s15, 1
      %s21 = ssub.s32 %s15, 2
      %s28 = sadd.s32 1, %s23
      %p29 = scmp.ge.s32.totalorder %s28, 1
      %s30 = scalar_select %p29, 0, %s28
      %s31 = sadd.s32 1, %s22
      %s32 = scalar_select %p29, %s31, %s22
      %p33 = scmp.ge.s32.totalorder %s32, 2
      %s34 = scalar_select %p33, 0, %s32
      %s35 = ssub.s32 %s22, %s34
      %s36 = ssub.s32 %s23, %s30
      %s37 = sor.u32 %s35, %s36
      %p38 = scmp.eq.s32.totalorder %s37, 0
      %s40 = sadd.s32 %s39, 1
      %s41 = scalar_select %p38, %s39, %s40
      %p44 = pneg %p38
      %p45 = scmp.eq.s32.totalorder %s15, 1
      %p46 = por %p44, %p45
      %p47 = scmp.ne.s32.totalorder %s39, %s42
      %p48 = scmp.eq.s32.totalorder %s15, 0
      %p49 = por %p47, %p48
      %p50 = scmp.ne.s32.totalorder %s39, %s42
      %p51 = scmp.eq.s32.totalorder %s20, 1
      %p52 = por %p50, %p51
      %p53 = scmp.ne.s32.totalorder %s42, %s43
      %p54 = scmp.eq.s32.totalorder %s20, 0
      %p55 = por %p53, %p54
      %p56 = scmp.ne.s32.totalorder %s42, %s43
      %p57 = scmp.eq.s32.totalorder %s21, 1
      %p58 = por %p56, %p57
      %p60 = scmp.ne.s32.totalorder %s43, %s59
      %p61 = scmp.eq.s32.totalorder %s21, 0
      %p62 = por %p60, %p61
      %s64 = sadd.s32 %s63, 1
      %p67 = scmp.eq.s32.totalorder %s15, 1
      %p68 = scmp.ne.s32.totalorder %s63, %s65
      %p69 = scmp.eq.s32.totalorder %s15, 0
      %p70 = por %p68, %p69
      %p71 = scmp.ne.s32.totalorder %s63, %s65
      %p72 = scmp.eq.s32.totalorder %s20, 1
      %p73 = por %p71, %p72
      %p74 = scmp.ne.s32.totalorder %s65, %s66
      %p75 = scmp.eq.s32.totalorder %s20, 0
      %p76 = por %p74, %p75
      %p77 = scmp.ne.s32.totalorder %s65, %s66
      %p78 = scmp.eq.s32.totalorder %s21, 1
      %p79 = por %p77, %p78
      %p81 = scmp.ne.s32.totalorder %s66, %s80
      %p82 = scmp.eq.s32.totalorder %s21, 0
      %p83 = por %p81, %p82
      %s84 = ssub.s32 %s22, %s34
      %s85 = ssub.s32 %s23, %s30
      %s86 = sor.u32 %s84, %s85
      %p87 = scmp.eq.s32.totalorder %s86, 0
      %s89 = sadd.s32 %s88, 1
      %s90 = scalar_select %p87, %s88, %s89
      %p93 = pneg %p87
      %p94 = scmp.eq.s32.totalorder %s15, 1
      %p95 = por %p93, %p94
      %p96 = scmp.ne.s32.totalorder %s88, %s91
      %p97 = scmp.eq.s32.totalorder %s15, 0
      %p98 = por %p96, %p97
      %p99 = scmp.ne.s32.totalorder %s88, %s91
      %p100 = scmp.eq.s32.totalorder %s20, 1
      %p101 = por %p99, %p100
      %p102 = scmp.ne.s32.totalorder %s91, %s92
      %p103 = scmp.eq.s32.totalorder %s20, 0
      %p104 = por %p102, %p103
      %p105 = scmp.ne.s32.totalorder %s91, %s92
      %p106 = scmp.eq.s32.totalorder %s21, 1
      %p107 = por %p105, %p106
      %p109 = scmp.ne.s32.totalorder %s92, %s108
      %p110 = scmp.eq.s32.totalorder %s21, 0
      %p111 = por %p109, %p110
      %p112 = scmp.le.s32.totalorder 1, %s15
      %p113 = scmp.lt.s32.totalorder %s15, 3
      %p114 = pnand %p112, %p113
      %p115 = pneg %p114
      // Predicated region
      $region9: #{tpu_custom_call.1} parent=5 // pred_check
        _
      $region10: #{tpu_custom_call.1} parent=5 // pred_check_branch
        %117 = sbr.rel (%p114) target = $region12
      $region11: #{tpu_custom_call.1} parent=5 // pred_region
        %s118 = ssub.s32 %s15, 1
        // Predicated region
        $region13: #{tpu_custom_call.1} parent=11 // pred_check
          %p119 = pneg %p76
        $region14: #{tpu_custom_call.1} parent=11 // pred_check_branch
          %121 = sbr.rel (%p119) target = $region16
        $region15: #{tpu_custom_call.1} parent=11 // pred_region
          %123 = vsyncadd [#allocation6], 0
          %s124 = sshll.u32 %s1, 4
          %s125 = int_to_ptr.hbm [resolvable:$true] %s124
          %s126 = sshll.u32 [#allocation5], 4
          %s127 = int_to_ptr.vmem [resolvable:$true] %s126
          %132 = dma.hbm_to_vmem [thread:$0]  %s125, 2048, %s127, [#allocation6], 256, 256, 16
        $region16: #{tpu_custom_call.1} parent=11 // pred_fallthru
          _
      $region12: #{tpu_custom_call.1} parent=5 // pred_fallthru
        _
      %p133 = scmp.lt.s32.totalorder %s15, 2
      // Predicated region
      $region17: #{tpu_custom_call.1} parent=5 // pred_check
        %p134 = pneg %p133
      $region18: #{tpu_custom_call.1} parent=5 // pred_check_branch
        %136 = sbr.rel (%p134) target = $region20
      $region19: #{tpu_custom_call.1} parent=5 // pred_region
        // Predicated region
        $region21: #{tpu_custom_call.1} parent=19 // pred_check
          %p137 = pneg %p49
        $region22: #{tpu_custom_call.1} parent=19 // pred_check_branch
          %139 = sbr.rel (%p137) target = $region24
        $region23: #{tpu_custom_call.1} parent=19 // pred_region
          %s140 = sand.u32 %s39, 1
          %s141 = scalar_lea.sflag [#allocation3], %s140
          %s142 = sand.u32 %s39, 1
          %s143 = smul.addr %s142, 16
          %s144 = scalar_lea.vmem [#allocation2], %s143
          %s145 = smul.u32 2, %s23
          %147 = vsyncadd %s141, 0
          %s148 = smul.addr %s22, 2
          %s149 = sadd.s32 %s145, %s148
          %s150 = smul.addr %s149, 8
          %s151 = scalar_lea.hbm %s0, %s150
          %s152 = sshll.u32 %s151, 4
          %s153 = int_to_ptr.hbm [resolvable:$true] %s152
          %s154 = sshll.u32 %s144, 4
          %s155 = int_to_ptr.vmem [resolvable:$true] %s154
          %160 = dma.hbm_to_vmem [thread:$0]  %s153, 256, %s155, %s141, 128, 128, 8
        $region24: #{tpu_custom_call.1} parent=19 // pred_fallthru
          _
      $region20: #{tpu_custom_call.1} parent=5 // pred_fallthru
        _
      %p161 = scmp.le.s32.totalorder 1, %s15
      %p162 = scmp.lt.s32.totalorder %s15, 3
      %p163 = pnand %p161, %p162
      %p164 = pneg %p163
      // Predicated region
      $region25: #{tpu_custom_call.1} parent=5 // pred_check
        _
      $region26: #{tpu_custom_call.1} parent=5 // pred_check_branch
        %166 = sbr.rel (%p163) target = $region28
      $region27: #{tpu_custom_call.1} parent=5 // pred_region
        %s167 = ssub.s32 %s15, 1
        %s168 = sand.u32 %s42, 1
        %s169 = scalar_lea.sflag [#allocation3], %s168
        %s170 = sand.u32 %s42, 1
        %s171 = smul.addr %s170, 16
        %s172 = scalar_lea.vmem [#allocation2], %s171
        // Predicated region
        $region29: #{tpu_custom_call.1} parent=27 // pred_check
          %p173 = pneg %p55
        $region30: #{tpu_custom_call.1} parent=27 // pred_check_branch
          %175 = sbr.rel (%p173) target = $region32
        $region31: #{tpu_custom_call.1} parent=27 // pred_region
          %177 = dma.done %s169, 256
        $region32: #{tpu_custom_call.1} parent=27 // pred_fallthru
          _
        // Predicated region
        $region33: #{tpu_custom_call.1} parent=27 // pred_check
          %p178 = pneg %p76
        $region34: #{tpu_custom_call.1} parent=27 // pred_check_branch
          %180 = sbr.rel (%p178) target = $region36
        $region35: #{tpu_custom_call.1} parent=27 // pred_region
          %182 = dma.done [#allocation6], 2048
        $region36: #{tpu_custom_call.1} parent=27 // pred_fallthru
          _
        %s183 = sand.u32 %s42, 1
        %s184 = scalar_lea.sflag [#allocation3], %s183
        %s185 = sand.u32 %s42, 1
        %s186 = smul.addr %s185, 16
        %s187 = scalar_lea.vmem [#allocation2], %s186
        %p188 = pneg %p55
        %p189 = pneg %p52
        %p190 = pneg %p76
        %p191 = pneg %p73
        %p192 = pneg %p104
        %p193 = pneg %p101
        %s194 = sand.u32 %s91, 1
        %s195 = scalar_lea.sflag [#allocation4], %s194
        %s196 = sand.u32 %s91, 1
        %s197 = smul.addr %s196, 32
        %s198 = scalar_lea.vmem [#allocation7], %s197
        %s199 = smul.u32 2, %s25
        %s200 = smul.u32 2, %s25
        %v201 = vld [vmem:[%s172] sm:$0xff]
        %v202 = vld [vmem:[%s172 + $0x8] sm:$0xff]
        %v203 = vld [vmem:[#allocation5] sm:$0xff]
        %v204 = vld [vmem:[#allocation5 + $0x8] sm:$0xff]
        %v205 = vld [vmem:[#allocation5 + $0x10] sm:$0xff]
        %v206 = vld [vmem:[#allocation5 + $0x18] sm:$0xff]
        %v207 = vld [vmem:[#allocation5 + $0x20] sm:$0xff]
        %v208 = vld [vmem:[#allocation5 + $0x28] sm:$0xff]
        %v209 = vld [vmem:[#allocation5 + $0x30] sm:$0xff]
        %v210 = vld [vmem:[#allocation5 + $0x38] sm:$0xff]
        %v211 = vld [vmem:[#allocation5 + $0x40] sm:$0xff]
        %v212 = vld [vmem:[#allocation5 + $0x48] sm:$0xff]
        %v213 = vld [vmem:[#allocation5 + $0x50] sm:$0xff]
        %v214 = vld [vmem:[#allocation5 + $0x58] sm:$0xff]
        %v215 = vld [vmem:[#allocation5 + $0x60] sm:$0xff]
        %v216 = vld [vmem:[#allocation5 + $0x68] sm:$0xff]
        %v217 = vld [vmem:[#allocation5 + $0x70] sm:$0xff]
        %v218 = vld [vmem:[#allocation5 + $0x78] sm:$0xff]
        %vm219 = vcmask 523264
        %v221 = vsel %vm219, %v201, 0
        %v224 = vsel %vm219, %v202, 0
        %226 = vmatpush.msra.mxu0 0.0
        %227 = vmatpush.msra.mxu0 0.0
        %228 = vmatpush.msra.mxu0 0.0
        %229 = vmatpush.msra.mxu0 0.0
        %230 = vmatpush.msra.mxu0 0.0
        %231 = vmatpush.msra.mxu0 0.0
        %232 = vmatpush.msra.mxu0 0.0
        %233 = vmatpush.msra.mxu0 0.0
        %234 = vmatpush.msra.mxu0 %v217
        %235 = vmatpush.msra.mxu0 %v215
        %236 = vmatpush.msra.mxu0 %v213
        %237 = vmatpush.msra.mxu0 %v211
        %238 = vmatpush.msra.mxu0 %v209
        %239 = vmatpush.msra.mxu0 %v207
        %240 = vmatpush.msra.mxu0 %v205
        %241 = vmatpush.msra.mxu0 %v203
        %242 = vmatmul.f32.gmra.mxu0 %v221
        %v243 = vpop.f32.mrf.mxu0
        %v244 = vadd.f32 0.0, %v243
        %245 = vmatmul.f32.gmra.mxu0 %v224
        %v246 = vpop.f32.mrf.mxu0
        %v247 = vadd.f32 0.0, %v246
        %248 = vdwg.mxu0
        %249 = vmatpush.msra.mxu0 0.0
        %250 = vmatpush.msra.mxu0 0.0
        %251 = vmatpush.msra.mxu0 0.0
        %252 = vmatpush.msra.mxu0 0.0
        %253 = vmatpush.msra.mxu0 0.0
        %254 = vmatpush.msra.mxu0 0.0
        %255 = vmatpush.msra.mxu0 0.0
        %256 = vmatpush.msra.mxu0 0.0
        %257 = vmatpush.msra.mxu0 %v218
        %258 = vmatpush.msra.mxu0 %v216
        %259 = vmatpush.msra.mxu0 %v214
        %260 = vmatpush.msra.mxu0 %v212
        %261 = vmatpush.msra.mxu0 %v210
        %262 = vmatpush.msra.mxu0 %v208
        %263 = vmatpush.msra.mxu0 %v206
        %264 = vmatpush.msra.mxu0 %v204
        %265 = vmatmul.f32.gmra.mxu0 %v221
        %v266 = vpop.f32.mrf.mxu0
        %v267 = vadd.f32 0.0, %v266
        %268 = vmatmul.f32.gmra.mxu0 %v224
        %v269 = vpop.f32.mrf.mxu0
        %v270 = vadd.f32 0.0, %v269
        %271 = vdwg.mxu0
        %272 = vst [vmem:[%s198] sm:$0xff] %v244
        %273 = vst.msk [vmem:[%s198 + $0x8] sm:$0xff] %vm219, %v267
        %274 = vst [vmem:[%s198 + $0x10] sm:$0xff] %v247
        %275 = vst.msk [vmem:[%s198 + $0x18] sm:$0xff] %vm219, %v270
        %s276 = sand.u32 %s91, 1
        %s277 = scalar_lea.sflag [#allocation4], %s276
        %s278 = sand.u32 %s91, 1
        %s279 = smul.addr %s278, 32
        %s280 = scalar_lea.vmem [#allocation7], %s279
        // Predicated region
        $region37: #{tpu_custom_call.1} parent=27 // pred_check
          %p281 = pneg %p101
        $region38: #{tpu_custom_call.1} parent=27 // pred_check_branch
          %283 = sbr.rel (%p281) target = $region40
        $region39: #{tpu_custom_call.1} parent=27 // pred_region
          %s284 = smul.u32 2, %s25
          %286 = vsyncadd %s277, 0
          %s287 = smul.addr %s284, 2
          %s288 = smul.addr %s24, 4
          %s289 = sadd.s32 %s287, %s288
          %s290 = smul.addr %s289, 8
          %s291 = scalar_lea.hbm %s2, %s290
          %s292 = sshll.u32 %s280, 4
          %s293 = int_to_ptr.vmem [resolvable:$true] %s292
          %s294 = sshll.u32 %s291, 4
          %s295 = int_to_ptr.hbm [resolvable:$true] %s294
          %300 = dma.vmem_to_hbm [thread:$0]  %s293, 512, %s295, %s277, 256, 256, 16
        $region40: #{tpu_custom_call.1} parent=27 // pred_fallthru
          _
      $region28: #{tpu_custom_call.1} parent=5 // pred_fallthru
        _
      %p301 = scmp.le.s32.totalorder 2, %s15
      // Predicated region
      $region41: #{tpu_custom_call.1} parent=5 // pred_check
        %p302 = pneg %p301
      $region42: #{tpu_custom_call.1} parent=5 // pred_check_branch
        %304 = sbr.rel (%p302) target = $region44
      $region43: #{tpu_custom_call.1} parent=5 // pred_region
        %s305 = ssub.s32 %s15, 2
        // Predicated region
        $region45: #{tpu_custom_call.1} parent=43 // pred_check
          %p306 = pneg %p107
        $region46: #{tpu_custom_call.1} parent=43 // pred_check_branch
          %308 = sbr.rel (%p306) target = $region48
        $region47: #{tpu_custom_call.1} parent=43 // pred_region
          %s309 = sand.u32 %s92, 1
          %s310 = scalar_lea.sflag [#allocation4], %s309
          %s311 = sand.u32 %s92, 1
          %s312 = smul.addr %s311, 32
          %s313 = scalar_lea.vmem [#allocation7], %s312
          %315 = dma.done %s310, 512
        $region48: #{tpu_custom_call.1} parent=43 // pred_fallthru
          _
      $region44: #{tpu_custom_call.1} parent=5 // pred_fallthru
        _
    $region6: #{tpu_custom_call.1} parent=1 // loop_footer
      %s19 = sadd.s32 1, %s15
    $region7: #{tpu_custom_call.1} parent=1 // loop_footer_branch
      %14 = sbr.rel target = $region3
    $region8: #{tpu_custom_call.1} parent=1 // loop_exit
      _
    %316 = vsyncpa [#allocation3], 1
    %s317 = scalar_lea.sflag [#allocation3], 1
    %318 = vsyncpa %s317, 1
    %319 = vsyncpa [#allocation6], 1
    %320 = vsyncpa [#allocation4], 1
    %s321 = scalar_lea.sflag [#allocation4], 1
    %322 = vsyncpa %s321, 1

</llo_original>
